<compile_context>
chip_gen: v7x
topology: tpu7x:2x2x1
jax: 0.10.0
libtpu: 0.0.40
codegen_flags: <defaults>
</compile_context>

<pallas_src>
import functools

import jax
import jax.numpy as jnp
from jax import lax
from jax.experimental import pallas as pl
from jax.experimental.pallas import tpu as pltpu


def _round_up(x, m):
    return ((x + m - 1) // m) * m


def _knn_kernel(center_ref, coords_t_ref, dist_ref, idx_ref, *,
                k, d_dim, n_actual, n_tile, chunk_n, n_pad):
    """One (batch, M-tile, N-tile) grid step.

    center_ref   : (1, M_TILE, D)   centers for this M tile
    coords_t_ref : (1, D, N_TILE)   D-major coords for this N tile
    dist_ref     : (1, M_TILE, k)   running top-k squared dists (block is
                                    VMEM-resident across the N axis; sqrt on
                                    the last N tile)
    idx_ref      : (1, M_TILE, k)   running top-k indices
    """
    ni = pl.program_id(2)
    n_last = pl.num_programs(2) - 1
    inf = jnp.float32(jnp.inf)

    # Running top-k lives in registers for this step; persisted across the ni
    # axis via the VMEM-resident output block (garbage at ni==0 is discarded).
    is_first = ni == 0
    rd = jnp.where(is_first, inf, dist_ref[0])                 # (M_TILE, k) f32
    ri = jnp.where(is_first, jnp.int32(n_actual), idx_ref[0])  # (M_TILE, k) i32

    c = center_ref[0].astype(jnp.float32)                      # (M_TILE, D)

    col_local = lax.broadcasted_iota(jnp.int32, (1, chunk_n), 1)   # (1, chunk)
    pos2k = lax.broadcasted_iota(jnp.int32, (1, 2 * k), 1)         # (1, 2k)

    # NOTE: k and n_tile//chunk_n are assumed small enough to unroll; for very
    # large k a lax.fori_loop with bounded unroll would be preferable.
    n_chunks = n_tile // chunk_n
    for cc in range(n_chunks):
        cs = cc * chunk_n
        base = ni * n_tile + cs                                 # traced i32 scalar

        xt = coords_t_ref[0, :, cs:cs + chunk_n].astype(jnp.float32)  # (D, chunk)

        # ---- squared distances on the VPU (D tiny: MXU stays idle) ----
        # TODO(synk): optionally route -2*c@x through the MXU for small k.
        diff = c[:, 0:1] - xt[0:1, :]
        dsq = diff * diff                                       # (M_TILE, chunk)
        for dd in range(1, d_dim):
            diff = c[:, dd:dd + 1] - xt[dd:dd + 1, :]
            dsq = dsq + diff * diff

        # Mask padded columns only for the (statically known) chunks that can
        # overlap [N, n_pad) in the last N tile; no-op compare on earlier tiles.
        if n_pad != n_actual and (n_pad - n_tile) + cs + chunk_n > n_actual:
            dsq = jnp.where(base + col_local < n_actual, dsq, inf)

        # ---- this chunk's k best candidates, built in registers ----
        cand_d_cols = []
        cand_i_cols = []
        for j in range(k):
            row_min = jnp.min(dsq, axis=-1, keepdims=True)      # (M_TILE, 1)
            row_arg = jnp.min(
                jnp.where(dsq == row_min, col_local, jnp.int32(chunk_n)),
                axis=-1, keepdims=True)                         # (M_TILE, 1) i32
            cand_d_cols.append(row_min)
            cand_i_cols.append(row_arg + base)
            if j + 1 < k:
                # knock out only the chosen column (indices unique per row)
                dsq = jnp.where(col_local == row_arg, inf, dsq)

        cand_d = jnp.concatenate(cand_d_cols, axis=1)           # (M_TILE, k)
        cand_i = jnp.concatenate(cand_i_cols, axis=1)           # (M_TILE, k)

        # ---- merge 2k candidates -> new running top-k (sorted ascending) ----
        # Running entries come from earlier chunks/tiles (smaller indices), and
        # each half is index-ordered among equal values: tie-break on position.
        all_d = jnp.concatenate([rd, cand_d], axis=1)           # (M_TILE, 2k)
        all_i = jnp.concatenate([ri, cand_i], axis=1)
        new_d_cols = []
        new_i_cols = []
        for j in range(k):
            v = jnp.min(all_d, axis=-1, keepdims=True)          # (M_TILE, 1)
            sel_pos = jnp.min(
                jnp.where(all_d == v, pos2k, jnp.int32(2 * k)),
                axis=-1, keepdims=True)
            sel = pos2k == sel_pos                              # one-hot per row
            new_d_cols.append(v)
            new_i_cols.append(jnp.sum(jnp.where(sel, all_i, 0),
                                      axis=-1, keepdims=True))
            if j + 1 < k:
                all_d = jnp.where(sel, inf, all_d)
        rd = jnp.concatenate(new_d_cols, axis=1)
        ri = jnp.concatenate(new_i_cols, axis=1)

    # ---- one block store per step; sqrt(clamp) fused into the last store ----
    final_d = jnp.sqrt(jnp.maximum(rd, jnp.float32(1e-10)))
    dist_ref[0] = jnp.where(ni == n_last, final_d, rd)
    idx_ref[0] = ri


def knn(coords, center_coords=None, *, k, block_m=128, block_n=2048, chunk_n=256):
    """Pallas TPU KNN.

    coords:        (B, N, D) points to search.
    center_coords: (B, M, D) query centers, or None for self-KNN.
    Returns (dist, idx): (B, M, k) float32 / int32 (PyTorch returns int64).
    Note: if k > N the trailing entries are (inf, out-of-range sentinel).
    """
    if center_coords is None:
        center_coords = coords
    coords = jnp.asarray(coords)
    center_coords = jnp.asarray(center_coords)
    B, N, D = coords.shape
    M = center_coords.shape[1]
    assert center_coords.shape[0] == B and center_coords.shape[2] == D

    # M tile: multiple of 8 (sublane); N tile / chunk: multiples of 128 (lane).
    m_tile = min(_round_up(block_m, 8), _round_up(M, 8))
    m_pad = _round_up(M, m_tile)
    # v7x has 2 TensorCores: make the parallel grid extent splittable when possible.
    if B * (m_pad // m_tile) < 2 and M > 8:
        m_tile = _round_up((M + 1) // 2, 8)
        m_pad = _round_up(M, m_tile)

    n_tile = min(_round_up(block_n, 128), _round_up(N, 128))
    c_tile = min(_round_up(chunk_n, 128), n_tile)
    while n_tile % c_tile != 0:
        c_tile -= 128
    n_pad = _round_up(N, n_tile)

    # Zero-padding is fine: padded coord columns are masked to +inf in-kernel
    # (only for chunks that can see them) and padded center rows are sliced off
    # below.  coords go D-major so the lane axis of every streamed tile is N.
    center_p = jnp.pad(center_coords, ((0, 0), (0, m_pad - M), (0, 0)))
    coords_t = jnp.pad(jnp.swapaxes(coords, 1, 2), ((0, 0), (0, 0), (0, n_pad - N)))

    kernel = functools.partial(_knn_kernel, k=k, d_dim=D, n_actual=N,
                               n_tile=n_tile, chunk_n=c_tile, n_pad=n_pad)

    dist, idx = pl.pallas_call(
        kernel,
        out_shape=(
            jax.ShapeDtypeStruct((B, m_pad, k), jnp.float32),
            jax.ShapeDtypeStruct((B, m_pad, k), jnp.int32),
        ),
        grid_spec=pltpu.PrefetchScalarGridSpec(
            num_scalar_prefetch=0,
            grid=(B, m_pad // m_tile, n_pad // n_tile),
            in_specs=[
                pl.BlockSpec((1, m_tile, D), lambda b, mi, ni: (b, mi, 0)),
                pl.BlockSpec((1, D, n_tile), lambda b, mi, ni: (b, 0, ni)),
            ],
            out_specs=[
                pl.BlockSpec((1, m_tile, k), lambda b, mi, ni: (b, mi, 0)),
                pl.BlockSpec((1, m_tile, k), lambda b, mi, ni: (b, mi, 0)),
            ],
        ),
        compiler_params=pltpu.CompilerParams(
            dimension_semantics=("parallel", "parallel", "arbitrary"),
        ),
    )(center_p, coords_t)

    return dist[:, :M, :], idx[:, :M, :]


def _reference_knn(coords, center_coords, k):
    """Pure-JAX reference mirroring the PyTorch module."""
    c2 = jnp.sum(center_coords ** 2, axis=-1, keepdims=True)          # (B, M, 1)
    x2 = jnp.sum(coords ** 2, axis=-1)[:, None, :]                    # (B, 1, N)
    dmat = c2 + x2 - 2.0 * jnp.einsum("bmd,bnd->bmn", center_coords, coords)
    neg_top, idx = lax.top_k(-dmat, k)
    dist = jnp.sqrt(jnp.maximum(-neg_top, 1e-10))
    return dmat, dist, idx


if __name__ == "__main__":
    key = jax.random.PRNGKey(0)
    k1, k2, k3, k4 = jax.random.split(key, 4)

    # Case 1: small shapes from the module spec (self-KNN and explicit centers).
    B, N, M, D, K = 2, 16, 8, 3, 4
    coords = jax.random.normal(k1, (B, N, D), dtype=jnp.float32)
    center = jax.random.normal(k2, (B, M, D), dtype=jnp.float32)

    dist_self, idx_self = knn(coords, None, k=K)
    dist_c, idx_c = knn(coords, center, k=K)
    jax.block_until_ready((dist_self, idx_self, dist_c, idx_c))

    assert dist_self.shape == (B, N, K) and idx_self.shape == (B, N, K)
    assert dist_c.shape == (B, M, K) and idx_c.shape == (B, M, K)

    dmat, ref_d, _ = _reference_knn(coords, center, K)
    assert jnp.allclose(dist_c, ref_d, rtol=2e-3, atol=2e-3)
    d_at = jnp.take_along_axis(dmat, idx_c, axis=-1)
    assert jnp.allclose(jnp.sqrt(jnp.maximum(d_at, 1e-10)), dist_c,
                        rtol=2e-3, atol=2e-3)
    assert int(jnp.min(idx_c)) >= 0 and int(jnp.max(idx_c)) < N
    # self-KNN: each point's nearest neighbor is itself
    assert bool(jnp.all(idx_self[:, :, 0] == jnp.arange(N)[None, :]))

    # Case 2: exercise multi-chunk, multi-tile streaming + padding
    # (M, N not tile multiples; two chunks per N tile).
    B2, N2, M2, K2 = 2, 300, 20, 5
    coords2 = jax.random.normal(k3, (B2, N2, D), dtype=jnp.float32)
    center2 = jax.random.normal(k4, (B2, M2, D), dtype=jnp.float32)
    dist2, idx2 = knn(coords2, center2, k=K2, block_m=8, block_n=256, chunk_n=128)
    jax.block_until_ready((dist2, idx2))

    dmat2, ref_d2, _ = _reference_knn(coords2, center2, K2)
    assert jnp.allclose(dist2, ref_d2, rtol=2e-3, atol=2e-3)
    d_at2 = jnp.take_along_axis(dmat2, idx2, axis=-1)
    assert jnp.allclose(jnp.sqrt(jnp.maximum(d_at2, 1e-10)), dist2,
                        rtol=2e-3, atol=2e-3)
    assert int(jnp.min(idx2)) >= 0 and int(jnp.max(idx2)) < N2

    print("KERNEL_OK")
</pallas_src>

<mosaic_0001>
module attributes {stable_mosaic.version = 11 : i64} {
  func.func @_knn_kernel(%arg0: i32, %arg1: i32, %arg2: i32, %arg3: memref<1x16x3xf32, #tpu.memory_space<vmem>>, %arg4: memref<1x3x128xf32, #tpu.memory_space<vmem>>, %arg5: memref<1x16x4xf32, #tpu.memory_space<vmem>>, %arg6: memref<1x16x4xi32, #tpu.memory_space<vmem>>) attributes {dimension_semantics = [#tpu.dimension_semantics<parallel>, #tpu.dimension_semantics<parallel>, #tpu.dimension_semantics<arbitrary>], iteration_bounds = array<i64: 2, 1, 1>, scalar_prefetch = 0 : i64, scratch_operands = 0 : i64, tpu.core_type = #tpu.core_type<tc>, window_params = [{transform_indices = @transform_0, window_bounds = array<i64: 1, 16, 3>}, {transform_indices = @transform_1, window_bounds = array<i64: 1, 3, 128>}, {transform_indices = @transform_2, window_bounds = array<i64: 1, 16, 4>}, {transform_indices = @transform_3, window_bounds = array<i64: 1, 16, 4>}]} {
    %c0_i32 = arith.constant 0 : i32
    %0 = arith.cmpi eq, %arg2, %c0_i32 : i32
    %c0 = arith.constant 0 : index
    %c0_0 = arith.constant 0 : index
    %c0_1 = arith.constant 0 : index
    %1 = vector.load %arg5[%c0, %c0_0, %c0_1] : memref<1x16x4xf32, #tpu.memory_space<vmem>>, vector<1x16x4xf32>
    %2 = vector.shape_cast %1 : vector<1x16x4xf32> to vector<16x4xf32>
    %cst = arith.constant 0x7F800000 : f32
    %3 = vector.broadcast %cst : f32 to vector<16x4xf32>
    %4 = arith.select %0, %3, %2 : vector<16x4xf32>
    %c0_2 = arith.constant 0 : index
    %c0_3 = arith.constant 0 : index
    %c0_4 = arith.constant 0 : index
    %5 = vector.load %arg6[%c0_2, %c0_3, %c0_4] : memref<1x16x4xi32, #tpu.memory_space<vmem>>, vector<1x16x4xi32>
    %6 = vector.shape_cast %5 : vector<1x16x4xi32> to vector<16x4xi32>
    %c16_i32 = arith.constant 16 : i32
    %7 = vector.broadcast %c16_i32 : i32 to vector<16x4xi32>
    %8 = arith.select %0, %7, %6 : vector<16x4xi32>
    %c0_5 = arith.constant 0 : index
    %c0_6 = arith.constant 0 : index
    %c0_7 = arith.constant 0 : index
    %9 = vector.load %arg3[%c0_5, %c0_6, %c0_7] : memref<1x16x3xf32, #tpu.memory_space<vmem>>, vector<1x16x3xf32>
    %10 = vector.shape_cast %9 : vector<1x16x3xf32> to vector<16x3xf32>
    %11 = tpu.iota {dimensions = array<i32: 1>} : vector<1x128xi32>
    %12 = tpu.iota {dimensions = array<i32: 1>} : vector<1x8xi32>
    %c128_i32 = arith.constant 128 : i32
    %13 = arith.muli %arg2, %c128_i32 : i32
    %c0_i32_8 = arith.constant 0 : i32
    %14 = arith.addi %13, %c0_i32_8 : i32
    %c0_9 = arith.constant 0 : index
    %c0_10 = arith.constant 0 : index
    %c0_11 = arith.constant 0 : index
    %15 = vector.load %arg4[%c0_9, %c0_10, %c0_11] : memref<1x3x128xf32, #tpu.memory_space<vmem>>, vector<1x3x128xf32>
    %16 = vector.shape_cast %15 : vector<1x3x128xf32> to vector<3x128xf32>
    %17 = vector.extract_strided_slice %10 {offsets = [0, 0], sizes = [16, 1], strides = [1, 1]} : vector<16x3xf32> to vector<16x1xf32>
    %18 = vector.extract_strided_slice %16 {offsets = [0, 0], sizes = [1, 128], strides = [1, 1]} : vector<3x128xf32> to vector<1x128xf32>
    %19 = vector.broadcast %17 : vector<16x1xf32> to vector<16x128xf32>
    %20 = vector.broadcast %18 : vector<1x128xf32> to vector<16x128xf32>
    %21 = arith.subf %19, %20 : vector<16x128xf32>
    %22 = arith.mulf %21, %21 : vector<16x128xf32>
    %23 = vector.extract_strided_slice %10 {offsets = [0, 1], sizes = [16, 1], strides = [1, 1]} : vector<16x3xf32> to vector<16x1xf32>
    %24 = vector.extract_strided_slice %16 {offsets = [1, 0], sizes = [1, 128], strides = [1, 1]} : vector<3x128xf32> to vector<1x128xf32>
    %25 = vector.broadcast %23 : vector<16x1xf32> to vector<16x128xf32>
    %26 = vector.broadcast %24 : vector<1x128xf32> to vector<16x128xf32>
    %27 = arith.subf %25, %26 : vector<16x128xf32>
    %28 = arith.mulf %27, %27 : vector<16x128xf32>
    %29 = arith.addf %22, %28 : vector<16x128xf32>
    %30 = vector.extract_strided_slice %10 {offsets = [0, 2], sizes = [16, 1], strides = [1, 1]} : vector<16x3xf32> to vector<16x1xf32>
    %31 = vector.extract_strided_slice %16 {offsets = [2, 0], sizes = [1, 128], strides = [1, 1]} : vector<3x128xf32> to vector<1x128xf32>
    %32 = vector.broadcast %30 : vector<16x1xf32> to vector<16x128xf32>
    %33 = vector.broadcast %31 : vector<1x128xf32> to vector<16x128xf32>
    %34 = arith.subf %32, %33 : vector<16x128xf32>
    %35 = arith.mulf %34, %34 : vector<16x128xf32>
    %36 = arith.addf %29, %35 : vector<16x128xf32>
    %37 = vector.broadcast %14 : i32 to vector<1x128xi32>
    %38 = arith.addi %37, %11 : vector<1x128xi32>
    %c16_i32_12 = arith.constant 16 : i32
    %39 = vector.broadcast %c16_i32_12 : i32 to vector<1x128xi32>
    %40 = arith.cmpi slt, %38, %39 : vector<1x128xi32>
    %cst_13 = arith.constant 0x7F800000 : f32
    %41 = vector.shape_cast %40 : vector<1x128xi1> to vector<1x128xi1>
    %42 = vector.broadcast %41 : vector<1x128xi1> to vector<16x128xi1>
    %43 = vector.broadcast %cst_13 : f32 to vector<16x128xf32>
    %44 = arith.select %42, %36, %43 : vector<16x128xi1>, vector<16x128xf32>
    %cst_14 = arith.constant dense<0x7F800000> : vector<16xf32>
    %45 = vector.multi_reduction <minimumf>, %44, %cst_14 [1] : vector<16x128xf32> to vector<16xf32>
    %46 = vector.shape_cast %45 : vector<16xf32> to vector<16x1xf32>
    %47 = vector.broadcast %46 : vector<16x1xf32> to vector<16x128xf32>
    %48 = arith.cmpf oeq, %44, %47 : vector<16x128xf32>
    %c128_i32_15 = arith.constant 128 : i32
    %49 = vector.shape_cast %11 : vector<1x128xi32> to vector<1x128xi32>
    %50 = vector.broadcast %49 : vector<1x128xi32> to vector<16x128xi32>
    %51 = vector.broadcast %c128_i32_15 : i32 to vector<16x128xi32>
    %52 = arith.select %48, %50, %51 : vector<16x128xi1>, vector<16x128xi32>
    %cst_16 = arith.constant dense<2147483647> : vector<16xi32>
    %53 = vector.multi_reduction <minsi>, %52, %cst_16 [1] : vector<16x128xi32> to vector<16xi32>
    %54 = vector.shape_cast %53 : vector<16xi32> to vector<16x1xi32>
    %55 = vector.broadcast %14 : i32 to vector<16x1xi32>
    %56 = arith.addi %54, %55 : vector<16x1xi32>
    %57 = vector.broadcast %11 : vector<1x128xi32> to vector<16x128xi32>
    %58 = vector.broadcast %54 : vector<16x1xi32> to vector<16x128xi32>
    %59 = arith.cmpi eq, %57, %58 : vector<16x128xi32>
    %cst_17 = arith.constant 0x7F800000 : f32
    %60 = vector.broadcast %cst_17 : f32 to vector<16x128xf32>
    %61 = arith.select %59, %60, %44 : vector<16x128xi1>, vector<16x128xf32>
    %cst_18 = arith.constant dense<0x7F800000> : vector<16xf32>
    %62 = vector.multi_reduction <minimumf>, %61, %cst_18 [1] : vector<16x128xf32> to vector<16xf32>
    %63 = vector.shape_cast %62 : vector<16xf32> to vector<16x1xf32>
    %64 = vector.broadcast %63 : vector<16x1xf32> to vector<16x128xf32>
    %65 = arith.cmpf oeq, %61, %64 : vector<16x128xf32>
    %c128_i32_19 = arith.constant 128 : i32
    %66 = vector.shape_cast %11 : vector<1x128xi32> to vector<1x128xi32>
    %67 = vector.broadcast %66 : vector<1x128xi32> to vector<16x128xi32>
    %68 = vector.broadcast %c128_i32_19 : i32 to vector<16x128xi32>
    %69 = arith.select %65, %67, %68 : vector<16x128xi1>, vector<16x128xi32>
    %cst_20 = arith.constant dense<2147483647> : vector<16xi32>
    %70 = vector.multi_reduction <minsi>, %69, %cst_20 [1] : vector<16x128xi32> to vector<16xi32>
    %71 = vector.shape_cast %70 : vector<16xi32> to vector<16x1xi32>
    %72 = vector.broadcast %14 : i32 to vector<16x1xi32>
    %73 = arith.addi %71, %72 : vector<16x1xi32>
    %74 = vector.broadcast %11 : vector<1x128xi32> to vector<16x128xi32>
    %75 = vector.broadcast %71 : vector<16x1xi32> to vector<16x128xi32>
    %76 = arith.cmpi eq, %74, %75 : vector<16x128xi32>
    %cst_21 = arith.constant 0x7F800000 : f32
    %77 = vector.broadcast %cst_21 : f32 to vector<16x128xf32>
    %78 = arith.select %76, %77, %61 : vector<16x128xi1>, vector<16x128xf32>
    %cst_22 = arith.constant dense<0x7F800000> : vector<16xf32>
    %79 = vector.multi_reduction <minimumf>, %78, %cst_22 [1] : vector<16x128xf32> to vector<16xf32>
    %80 = vector.shape_cast %79 : vector<16xf32> to vector<16x1xf32>
    %81 = vector.broadcast %80 : vector<16x1xf32> to vector<16x128xf32>
    %82 = arith.cmpf oeq, %78, %81 : vector<16x128xf32>
    %c128_i32_23 = arith.constant 128 : i32
    %83 = vector.shape_cast %11 : vector<1x128xi32> to vector<1x128xi32>
    %84 = vector.broadcast %83 : vector<1x128xi32> to vector<16x128xi32>
    %85 = vector.broadcast %c128_i32_23 : i32 to vector<16x128xi32>
    %86 = arith.select %82, %84, %85 : vector<16x128xi1>, vector<16x128xi32>
    %cst_24 = arith.constant dense<2147483647> : vector<16xi32>
    %87 = vector.multi_reduction <minsi>, %86, %cst_24 [1] : vector<16x128xi32> to vector<16xi32>
    %88 = vector.shape_cast %87 : vector<16xi32> to vector<16x1xi32>
    %89 = vector.broadcast %14 : i32 to vector<16x1xi32>
    %90 = arith.addi %88, %89 : vector<16x1xi32>
    %91 = vector.broadcast %11 : vector<1x128xi32> to vector<16x128xi32>
    %92 = vector.broadcast %88 : vector<16x1xi32> to vector<16x128xi32>
    %93 = arith.cmpi eq, %91, %92 : vector<16x128xi32>
    %cst_25 = arith.constant 0x7F800000 : f32
    %94 = vector.broadcast %cst_25 : f32 to vector<16x128xf32>
    %95 = arith.select %93, %94, %78 : vector<16x128xi1>, vector<16x128xf32>
    %cst_26 = arith.constant dense<0x7F800000> : vector<16xf32>
    %96 = vector.multi_reduction <minimumf>, %95, %cst_26 [1] : vector<16x128xf32> to vector<16xf32>
    %97 = vector.shape_cast %96 : vector<16xf32> to vector<16x1xf32>
    %98 = vector.broadcast %97 : vector<16x1xf32> to vector<16x128xf32>
    %99 = arith.cmpf oeq, %95, %98 : vector<16x128xf32>
    %c128_i32_27 = arith.constant 128 : i32
    %100 = vector.shape_cast %11 : vector<1x128xi32> to vector<1x128xi32>
    %101 = vector.broadcast %100 : vector<1x128xi32> to vector<16x128xi32>
    %102 = vector.broadcast %c128_i32_27 : i32 to vector<16x128xi32>
    %103 = arith.select %99, %101, %102 : vector<16x128xi1>, vector<16x128xi32>
    %cst_28 = arith.constant dense<2147483647> : vector<16xi32>
    %104 = vector.multi_reduction <minsi>, %103, %cst_28 [1] : vector<16x128xi32> to vector<16xi32>
    %105 = vector.shape_cast %104 : vector<16xi32> to vector<16x1xi32>
    %106 = vector.broadcast %14 : i32 to vector<16x1xi32>
    %107 = arith.addi %105, %106 : vector<16x1xi32>
    %108 = tpu.concatenate %46, %63, %80, %97 in 1 : vector<16x1xf32>, vector<16x1xf32>, vector<16x1xf32>, vector<16x1xf32> -> vector<16x4xf32>
    %109 = tpu.concatenate %56, %73, %90, %107 in 1 : vector<16x1xi32>, vector<16x1xi32>, vector<16x1xi32>, vector<16x1xi32> -> vector<16x4xi32>
    %110 = tpu.concatenate %4, %108 in 1 : vector<16x4xf32>, vector<16x4xf32> -> vector<16x8xf32>
    %111 = tpu.concatenate %8, %109 in 1 : vector<16x4xi32>, vector<16x4xi32> -> vector<16x8xi32>
    %cst_29 = arith.constant dense<0x7F800000> : vector<16xf32>
    %112 = vector.multi_reduction <minimumf>, %110, %cst_29 [1] : vector<16x8xf32> to vector<16xf32>
    %113 = vector.shape_cast %112 : vector<16xf32> to vector<16x1xf32>
    %114 = vector.broadcast %113 : vector<16x1xf32> to vector<16x8xf32>
    %115 = arith.cmpf oeq, %110, %114 : vector<16x8xf32>
    %c8_i32 = arith.constant 8 : i32
    %116 = vector.shape_cast %12 : vector<1x8xi32> to vector<1x8xi32>
    %117 = vector.broadcast %116 : vector<1x8xi32> to vector<16x8xi32>
    %118 = vector.broadcast %c8_i32 : i32 to vector<16x8xi32>
    %119 = arith.select %115, %117, %118 : vector<16x8xi1>, vector<16x8xi32>
    %cst_30 = arith.constant dense<2147483647> : vector<16xi32>
    %120 = vector.multi_reduction <minsi>, %119, %cst_30 [1] : vector<16x8xi32> to vector<16xi32>
    %121 = vector.shape_cast %120 : vector<16xi32> to vector<16x1xi32>
    %122 = vector.broadcast %12 : vector<1x8xi32> to vector<16x8xi32>
    %123 = vector.broadcast %121 : vector<16x1xi32> to vector<16x8xi32>
    %124 = arith.cmpi eq, %122, %123 : vector<16x8xi32>
    %c0_i32_31 = arith.constant 0 : i32
    %125 = vector.broadcast %c0_i32_31 : i32 to vector<16x8xi32>
    %126 = arith.select %124, %111, %125 : vector<16x8xi1>, vector<16x8xi32>
    %cst_32 = arith.constant dense<0> : vector<16xi32>
    %127 = vector.multi_reduction <add>, %126, %cst_32 [1] : vector<16x8xi32> to vector<16xi32>
    %128 = vector.shape_cast %127 : vector<16xi32> to vector<16x1xi32>
    %cst_33 = arith.constant 0x7F800000 : f32
    %129 = vector.broadcast %cst_33 : f32 to vector<16x8xf32>
    %130 = arith.select %124, %129, %110 : vector<16x8xi1>, vector<16x8xf32>
    %cst_34 = arith.constant dense<0x7F800000> : vector<16xf32>
    %131 = vector.multi_reduction <minimumf>, %130, %cst_34 [1] : vector<16x8xf32> to vector<16xf32>
    %132 = vector.shape_cast %131 : vector<16xf32> to vector<16x1xf32>
    %133 = vector.broadcast %132 : vector<16x1xf32> to vector<16x8xf32>
    %134 = arith.cmpf oeq, %130, %133 : vector<16x8xf32>
    %c8_i32_35 = arith.constant 8 : i32
    %135 = vector.shape_cast %12 : vector<1x8xi32> to vector<1x8xi32>
    %136 = vector.broadcast %135 : vector<1x8xi32> to vector<16x8xi32>
    %137 = vector.broadcast %c8_i32_35 : i32 to vector<16x8xi32>
    %138 = arith.select %134, %136, %137 : vector<16x8xi1>, vector<16x8xi32>
    %cst_36 = arith.constant dense<2147483647> : vector<16xi32>
    %139 = vector.multi_reduction <minsi>, %138, %cst_36 [1] : vector<16x8xi32> to vector<16xi32>
    %140 = vector.shape_cast %139 : vector<16xi32> to vector<16x1xi32>
    %141 = vector.broadcast %12 : vector<1x8xi32> to vector<16x8xi32>
    %142 = vector.broadcast %140 : vector<16x1xi32> to vector<16x8xi32>
    %143 = arith.cmpi eq, %141, %142 : vector<16x8xi32>
    %c0_i32_37 = arith.constant 0 : i32
    %144 = vector.broadcast %c0_i32_37 : i32 to vector<16x8xi32>
    %145 = arith.select %143, %111, %144 : vector<16x8xi1>, vector<16x8xi32>
    %cst_38 = arith.constant dense<0> : vector<16xi32>
    %146 = vector.multi_reduction <add>, %145, %cst_38 [1] : vector<16x8xi32> to vector<16xi32>
    %147 = vector.shape_cast %146 : vector<16xi32> to vector<16x1xi32>
    %cst_39 = arith.constant 0x7F800000 : f32
    %148 = vector.broadcast %cst_39 : f32 to vector<16x8xf32>
    %149 = arith.select %143, %148, %130 : vector<16x8xi1>, vector<16x8xf32>
    %cst_40 = arith.constant dense<0x7F800000> : vector<16xf32>
    %150 = vector.multi_reduction <minimumf>, %149, %cst_40 [1] : vector<16x8xf32> to vector<16xf32>
    %151 = vector.shape_cast %150 : vector<16xf32> to vector<16x1xf32>
    %152 = vector.broadcast %151 : vector<16x1xf32> to vector<16x8xf32>
    %153 = arith.cmpf oeq, %149, %152 : vector<16x8xf32>
    %c8_i32_41 = arith.constant 8 : i32
    %154 = vector.shape_cast %12 : vector<1x8xi32> to vector<1x8xi32>
    %155 = vector.broadcast %154 : vector<1x8xi32> to vector<16x8xi32>
    %156 = vector.broadcast %c8_i32_41 : i32 to vector<16x8xi32>
    %157 = arith.select %153, %155, %156 : vector<16x8xi1>, vector<16x8xi32>
    %cst_42 = arith.constant dense<2147483647> : vector<16xi32>
    %158 = vector.multi_reduction <minsi>, %157, %cst_42 [1] : vector<16x8xi32> to vector<16xi32>
    %159 = vector.shape_cast %158 : vector<16xi32> to vector<16x1xi32>
    %160 = vector.broadcast %12 : vector<1x8xi32> to vector<16x8xi32>
    %161 = vector.broadcast %159 : vector<16x1xi32> to vector<16x8xi32>
    %162 = arith.cmpi eq, %160, %161 : vector<16x8xi32>
    %c0_i32_43 = arith.constant 0 : i32
    %163 = vector.broadcast %c0_i32_43 : i32 to vector<16x8xi32>
    %164 = arith.select %162, %111, %163 : vector<16x8xi1>, vector<16x8xi32>
    %cst_44 = arith.constant dense<0> : vector<16xi32>
    %165 = vector.multi_reduction <add>, %164, %cst_44 [1] : vector<16x8xi32> to vector<16xi32>
    %166 = vector.shape_cast %165 : vector<16xi32> to vector<16x1xi32>
    %cst_45 = arith.constant 0x7F800000 : f32
    %167 = vector.broadcast %cst_45 : f32 to vector<16x8xf32>
    %168 = arith.select %162, %167, %149 : vector<16x8xi1>, vector<16x8xf32>
    %cst_46 = arith.constant dense<0x7F800000> : vector<16xf32>
    %169 = vector.multi_reduction <minimumf>, %168, %cst_46 [1] : vector<16x8xf32> to vector<16xf32>
    %170 = vector.shape_cast %169 : vector<16xf32> to vector<16x1xf32>
    %171 = vector.broadcast %170 : vector<16x1xf32> to vector<16x8xf32>
    %172 = arith.cmpf oeq, %168, %171 : vector<16x8xf32>
    %c8_i32_47 = arith.constant 8 : i32
    %173 = vector.shape_cast %12 : vector<1x8xi32> to vector<1x8xi32>
    %174 = vector.broadcast %173 : vector<1x8xi32> to vector<16x8xi32>
    %175 = vector.broadcast %c8_i32_47 : i32 to vector<16x8xi32>
    %176 = arith.select %172, %174, %175 : vector<16x8xi1>, vector<16x8xi32>
    %cst_48 = arith.constant dense<2147483647> : vector<16xi32>
    %177 = vector.multi_reduction <minsi>, %176, %cst_48 [1] : vector<16x8xi32> to vector<16xi32>
    %178 = vector.shape_cast %177 : vector<16xi32> to vector<16x1xi32>
    %179 = vector.broadcast %12 : vector<1x8xi32> to vector<16x8xi32>
    %180 = vector.broadcast %178 : vector<16x1xi32> to vector<16x8xi32>
    %181 = arith.cmpi eq, %179, %180 : vector<16x8xi32>
    %c0_i32_49 = arith.constant 0 : i32
    %182 = vector.broadcast %c0_i32_49 : i32 to vector<16x8xi32>
    %183 = arith.select %181, %111, %182 : vector<16x8xi1>, vector<16x8xi32>
    %cst_50 = arith.constant dense<0> : vector<16xi32>
    %184 = vector.multi_reduction <add>, %183, %cst_50 [1] : vector<16x8xi32> to vector<16xi32>
    %185 = vector.shape_cast %184 : vector<16xi32> to vector<16x1xi32>
    %186 = tpu.concatenate %113, %132, %151, %170 in 1 : vector<16x1xf32>, vector<16x1xf32>, vector<16x1xf32>, vector<16x1xf32> -> vector<16x4xf32>
    %187 = tpu.concatenate %128, %147, %166, %185 in 1 : vector<16x1xi32>, vector<16x1xi32>, vector<16x1xi32>, vector<16x1xi32> -> vector<16x4xi32>
    %cst_51 = arith.constant 1.000000e-10 : f32
    %188 = vector.broadcast %cst_51 : f32 to vector<16x4xf32>
    %189 = arith.maximumf %186, %188 : vector<16x4xf32>
    %190 = math.sqrt %189 : vector<16x4xf32>
    %c0_i32_52 = arith.constant 0 : i32
    %191 = arith.cmpi eq, %arg2, %c0_i32_52 : i32
    %192 = arith.select %191, %190, %186 : vector<16x4xf32>
    %c0_53 = arith.constant 0 : index
    %c0_54 = arith.constant 0 : index
    %c0_55 = arith.constant 0 : index
    %193 = vector.load %arg5[%c0_53, %c0_54, %c0_55] : memref<1x16x4xf32, #tpu.memory_space<vmem>>, vector<1x16x4xf32>
    %194 = vector.shape_cast %193 : vector<1x16x4xf32> to vector<16x4xf32>
    %195 = vector.shape_cast %192 : vector<16x4xf32> to vector<1x16x4xf32>
    tpu.vector_store %arg5[%c0_53, %c0_54, %c0_55], %195 {strides = array<i32>} : memref<1x16x4xf32, #tpu.memory_space<vmem>>, vector<1x16x4xf32>,
    %c0_56 = arith.constant 0 : index
    %c0_57 = arith.constant 0 : index
    %c0_58 = arith.constant 0 : index
    %196 = vector.load %arg6[%c0_56, %c0_57, %c0_58] : memref<1x16x4xi32, #tpu.memory_space<vmem>>, vector<1x16x4xi32>
    %197 = vector.shape_cast %196 : vector<1x16x4xi32> to vector<16x4xi32>
    %198 = vector.shape_cast %187 : vector<16x4xi32> to vector<1x16x4xi32>
    tpu.vector_store %arg6[%c0_56, %c0_57, %c0_58], %198 {strides = array<i32>} : memref<1x16x4xi32, #tpu.memory_space<vmem>>, vector<1x16x4xi32>,
    return
  }
  func.func @transform_0(%arg0: i32, %arg1: i32, %arg2: i32) -> (i32, i32, i32) {
    %c0_i32 = arith.constant 0 : i32
    %c0_i32_0 = arith.constant 0 : i32
    return %arg0, %arg1, %c0_i32 : i32, i32, i32
  }
  func.func @transform_1(%arg0: i32, %arg1: i32, %arg2: i32) -> (i32, i32, i32) {
    %c0_i32 = arith.constant 0 : i32
    %c0_i32_0 = arith.constant 0 : i32
    return %arg0, %c0_i32, %arg2 : i32, i32, i32
  }
  func.func @transform_2(%arg0: i32, %arg1: i32, %arg2: i32) -> (i32, i32, i32) {
    %c0_i32 = arith.constant 0 : i32
    %c0_i32_0 = arith.constant 0 : i32
    return %arg0, %arg1, %c0_i32 : i32, i32, i32
  }
  func.func @transform_3(%arg0: i32, %arg1: i32, %arg2: i32) -> (i32, i32, i32) {
    %c0_i32 = arith.constant 0 : i32
    %c0_i32_0 = arith.constant 0 : i32
    return %arg0, %arg1, %c0_i32 : i32, i32, i32
  }
}

</mosaic_0001>

<llo_original>
// kernel: tpu_custom_call.1
$region0: #{tpu_custom_call.1}
  #allocation0 [shape = 'u32[]', space=smem, size = 0x4, offset = 0x4, fixed_abs, tag = 'smem constant byte address 0x4 - core index']
  #allocation1 [shape = 'u32[144,128]{1,0:T(1,128)}', space=vmem, size = 0x12000, scoped, tag = 'internal scratch']
  %s0 = inlined_call_operand.vmem [shape: f32[2,16,3], index: 0, kind: input, shape index: {}]
  %s1 = inlined_call_operand.vmem [shape: f32[2,3,128], index: 1, kind: input, shape index: {}]
  %s2 = inlined_call_operand.vmem [shape: f32[2,16,4], index: 2, kind: output, shape index: {0}]
  %s3 = inlined_call_operand.vmem [shape: s32[2,16,4], index: 3, kind: output, shape index: {1}]
  %4 = xla_tuple %s2, %s3
  %s5 = sld [smem:[#allocation0]]
  $region49: #{tpu_custom_call.1} parent=0
    _
  %s7 = ssub.s32 1, %s5
  %s8 = scalar_select 0, %s7, %s5
  loop: start=0, step=1, limit=4
  $region2: #{tpu_custom_call.1} parent=0 // loop_pre_header
    _
  $region3: #{tpu_custom_call.1} parent=0 // loop_header
    %s10 = sphi 0, %s14
    %p11 = scmp.ge.s32.totalorder %s10, 4
    %s17 = sphi 0, %s36
    %s18 = sphi 0, %s32
    %s19 = sphi 0, %s28
    %s20 = sphi 0, %s17
    %s21 = sphi 0, %s18
    %s22 = sphi 0, %s19
    %s23 = sphi 0, %s20
    %s24 = sphi 0, %s21
    %s25 = sphi 0, %s22
    %s41 = sphi 0, %s43
    %s44 = sphi 0, %s41
    %s45 = sphi 0, %s44
    %s61 = sphi 0, %s45
    %s69 = sphi 0, %s71
    %s72 = sphi 0, %s69
    %s73 = sphi 0, %s72
    %s89 = sphi 0, %s73
    %s97 = sphi 0, %s99
    %s100 = sphi 0, %s97
    %s101 = sphi 0, %s100
    %s117 = sphi 0, %s101
    %s125 = sphi 0, %s127
    %s128 = sphi 0, %s125
    %s129 = sphi 0, %s128
    %s145 = sphi 0, %s129
  $region4: #{tpu_custom_call.1} parent=0 // loop_header_branch
    %13 = sbr.rel (%p11) target = $region8
  $region5: #{tpu_custom_call.1} parent=0 // loop_body
    %s15 = ssub.s32 %s10, 1
    %s16 = ssub.s32 %s10, 2
    %s26 = sadd.s32 1, %s19
    %p27 = scmp.ge.s32.totalorder %s26, 1
    %s28 = scalar_select %p27, 0, %s26
    %s29 = sadd.s32 1, %s18
    %s30 = scalar_select %p27, %s29, %s18
    %p31 = scmp.ge.s32.totalorder %s30, 1
    %s32 = scalar_select %p31, 0, %s30
    %s33 = sadd.s32 1, %s17
    %s34 = scalar_select %p31, %s33, %s17
    %p35 = scmp.ge.s32.totalorder %s34, 2
    %s36 = scalar_select %p35, 0, %s34
    %s37 = ssub.s32 %s17, %s36
    %s38 = ssub.s32 %s18, %s32
    %s39 = sor.u32 %s37, %s38
    %p40 = scmp.eq.s32.totalorder %s39, 0
    %s42 = sadd.s32 %s41, 1
    %s43 = scalar_select %p40, %s41, %s42
    %p46 = pneg %p40
    %p47 = scmp.eq.s32.totalorder %s10, 1
    %p48 = por %p46, %p47
    %p49 = scmp.ne.s32.totalorder %s41, %s44
    %p50 = scmp.eq.s32.totalorder %s10, 0
    %p51 = por %p49, %p50
    %p52 = scmp.ne.s32.totalorder %s41, %s44
    %p53 = scmp.eq.s32.totalorder %s15, 1
    %p54 = por %p52, %p53
    %p55 = scmp.ne.s32.totalorder %s44, %s45
    %p56 = scmp.eq.s32.totalorder %s15, 0
    %p57 = por %p55, %p56
    %p58 = scmp.ne.s32.totalorder %s44, %s45
    %p59 = scmp.eq.s32.totalorder %s16, 1
    %p60 = por %p58, %p59
    %p62 = scmp.ne.s32.totalorder %s45, %s61
    %p63 = scmp.eq.s32.totalorder %s16, 0
    %p64 = por %p62, %p63
    %s65 = ssub.s32 %s17, %s36
    %s66 = ssub.s32 %s19, %s28
    %s67 = sor.u32 %s65, %s66
    %p68 = scmp.eq.s32.totalorder %s67, 0
    %s70 = sadd.s32 %s69, 1
    %s71 = scalar_select %p68, %s69, %s70
    %p74 = pneg %p68
    %p75 = scmp.eq.s32.totalorder %s10, 1
    %p76 = por %p74, %p75
    %p77 = scmp.ne.s32.totalorder %s69, %s72
    %p78 = scmp.eq.s32.totalorder %s10, 0
    %p79 = por %p77, %p78
    %p80 = scmp.ne.s32.totalorder %s69, %s72
    %p81 = scmp.eq.s32.totalorder %s15, 1
    %p82 = por %p80, %p81
    %p83 = scmp.ne.s32.totalorder %s72, %s73
    %p84 = scmp.eq.s32.totalorder %s15, 0
    %p85 = por %p83, %p84
    %p86 = scmp.ne.s32.totalorder %s72, %s73
    %p87 = scmp.eq.s32.totalorder %s16, 1
    %p88 = por %p86, %p87
    %p90 = scmp.ne.s32.totalorder %s73, %s89
    %p91 = scmp.eq.s32.totalorder %s16, 0
    %p92 = por %p90, %p91
    %s93 = ssub.s32 %s17, %s36
    %s94 = ssub.s32 %s18, %s32
    %s95 = sor.u32 %s93, %s94
    %p96 = scmp.eq.s32.totalorder %s95, 0
    %s98 = sadd.s32 %s97, 1
    %s99 = scalar_select %p96, %s97, %s98
    %p102 = pneg %p96
    %p103 = scmp.eq.s32.totalorder %s10, 1
    %p104 = por %p102, %p103
    %p105 = scmp.ne.s32.totalorder %s97, %s100
    %p106 = scmp.eq.s32.totalorder %s10, 0
    %p107 = por %p105, %p106
    %p108 = scmp.ne.s32.totalorder %s97, %s100
    %p109 = scmp.eq.s32.totalorder %s15, 1
    %p110 = por %p108, %p109
    %p111 = scmp.ne.s32.totalorder %s100, %s101
    %p112 = scmp.eq.s32.totalorder %s15, 0
    %p113 = por %p111, %p112
    %p114 = scmp.ne.s32.totalorder %s100, %s101
    %p115 = scmp.eq.s32.totalorder %s16, 1
    %p116 = por %p114, %p115
    %p118 = scmp.ne.s32.totalorder %s101, %s117
    %p119 = scmp.eq.s32.totalorder %s16, 0
    %p120 = por %p118, %p119
    %s121 = ssub.s32 %s17, %s36
    %s122 = ssub.s32 %s18, %s32
    %s123 = sor.u32 %s121, %s122
    %p124 = scmp.eq.s32.totalorder %s123, 0
    %s126 = sadd.s32 %s125, 1
    %s127 = scalar_select %p124, %s125, %s126
    %p130 = pneg %p124
    %p131 = scmp.eq.s32.totalorder %s10, 1
    %p132 = por %p130, %p131
    %p133 = scmp.ne.s32.totalorder %s125, %s128
    %p134 = scmp.eq.s32.totalorder %s10, 0
    %p135 = por %p133, %p134
    %p136 = scmp.ne.s32.totalorder %s125, %s128
    %p137 = scmp.eq.s32.totalorder %s15, 1
    %p138 = por %p136, %p137
    %p139 = scmp.ne.s32.totalorder %s128, %s129
    %p140 = scmp.eq.s32.totalorder %s15, 0
    %p141 = por %p139, %p140
    %p142 = scmp.ne.s32.totalorder %s128, %s129
    %p143 = scmp.eq.s32.totalorder %s16, 1
    %p144 = por %p142, %p143
    %p146 = scmp.ne.s32.totalorder %s129, %s145
    %p147 = scmp.eq.s32.totalorder %s16, 0
    %p148 = por %p146, %p147
    %p149 = scmp.le.s32.totalorder 1, %s10
    %p150 = scmp.lt.s32.totalorder %s10, 3
    %p151 = pnand %p149, %p150
    %p152 = pneg %p151
    // Predicated region
    $region9: #{tpu_custom_call.1} parent=5 // pred_check
      _
    $region10: #{tpu_custom_call.1} parent=5 // pred_check_branch
      %154 = sbr.rel (%p151) target = $region12
    $region11: #{tpu_custom_call.1} parent=5 // pred_region
      %s155 = ssub.s32 %s10, 1
    $region12: #{tpu_custom_call.1} parent=5 // pred_fallthru
      _
    %p156 = scmp.lt.s32.totalorder %s10, 2
    // Predicated region
    $region13: #{tpu_custom_call.1} parent=5 // pred_check
      %p157 = pneg %p156
    $region14: #{tpu_custom_call.1} parent=5 // pred_check_branch
      %159 = sbr.rel (%p157) target = $region16
    $region15: #{tpu_custom_call.1} parent=5 // pred_region
      // Predicated region
      $region17: #{tpu_custom_call.1} parent=15 // pred_check
        %p160 = pneg %p51
      $region18: #{tpu_custom_call.1} parent=15 // pred_check_branch
        %162 = sbr.rel (%p160) target = $region20
      $region19: #{tpu_custom_call.1} parent=15 // pred_region
        %s163 = smul.u32 2, %s18
        %p164 = scmp.lt.s32.totalorder %s17, 1
        %s165 = scalar_select %p164, %s17, 1
        %p166 = scmp.lt.s32.totalorder %s163, 1
        %s167 = scalar_select %p166, %s163, 1
        %s168 = smul.addr %s165, 2
        %s169 = sadd.s32 %s167, %s168
        %s170 = smul.addr %s169, 8
        %s171 = scalar_lea.vmem %s0, %s170
        %s172 = smul.u32 2, %s18
      $region20: #{tpu_custom_call.1} parent=15 // pred_fallthru
        _
      // Predicated region
      $region21: #{tpu_custom_call.1} parent=15 // pred_check
        %p173 = pneg %p79
      $region22: #{tpu_custom_call.1} parent=15 // pred_check_branch
        %175 = sbr.rel (%p173) target = $region24
      $region23: #{tpu_custom_call.1} parent=15 // pred_region
        %p176 = scmp.lt.s32.totalorder %s17, 1
        %s177 = scalar_select %p176, %s17, 1
        %p178 = scmp.lt.s32.totalorder %s19, 0
        %s179 = scalar_select %p178, %s19, 0
        %s180 = sadd.s32 %s179, %s177
        %s181 = smul.addr %s180, 4
        %s182 = scalar_lea.vmem %s1, %s181
      $region24: #{tpu_custom_call.1} parent=15 // pred_fallthru
        _
    $region16: #{tpu_custom_call.1} parent=5 // pred_fallthru
      _
    %p183 = scmp.le.s32.totalorder 1, %s10
    %p184 = scmp.lt.s32.totalorder %s10, 3
    %p185 = pnand %p183, %p184
    %p186 = pneg %p185
    // Predicated region
    $region25: #{tpu_custom_call.1} parent=5 // pred_check
      _
    $region26: #{tpu_custom_call.1} parent=5 // pred_check_branch
      %188 = sbr.rel (%p185) target = $region28
    $region27: #{tpu_custom_call.1} parent=5 // pred_region
      %s189 = ssub.s32 %s10, 1
      %s190 = smul.u32 2, %s21
      %p191 = scmp.lt.s32.totalorder %s20, 1
      %s192 = scalar_select %p191, %s20, 1
      %p193 = scmp.lt.s32.totalorder %s190, 1
      %s194 = scalar_select %p193, %s190, 1
      %s195 = smul.addr %s192, 2
      %s196 = sadd.s32 %s194, %s195
      %s197 = smul.addr %s196, 8
      %s198 = scalar_lea.vmem %s0, %s197
      %p199 = pneg %p57
      %p200 = pneg %p54
      %p201 = scmp.lt.s32.totalorder %s20, 1
      %s202 = scalar_select %p201, %s20, 1
      %p203 = scmp.lt.s32.totalorder %s22, 0
      %s204 = scalar_select %p203, %s22, 0
      %s205 = sadd.s32 %s204, %s202
      %s206 = smul.addr %s205, 4
      %s207 = scalar_lea.vmem %s1, %s206
      %p208 = pneg %p85
      %p209 = pneg %p82
      %p210 = pneg %p113
      %p211 = pneg %p110
      %s212 = smul.u32 2, %s21
      %p213 = scmp.lt.s32.totalorder %s20, 1
      %s214 = scalar_select %p213, %s20, 1
      %p215 = scmp.lt.s32.totalorder %s212, 1
      %s216 = scalar_select %p215, %s212, 1
      %s217 = smul.addr %s214, 2
      %s218 = sadd.s32 %s216, %s217
      %s219 = smul.addr %s218, 8
      %s220 = scalar_lea.vmem %s2, %s219
      %p221 = pneg %p141
      %p222 = pneg %p138
      %s223 = smul.u32 2, %s21
      %p224 = scmp.lt.s32.totalorder %s20, 1
      %s225 = scalar_select %p224, %s20, 1
      %p226 = scmp.lt.s32.totalorder %s223, 1
      %s227 = scalar_select %p226, %s223, 1
      %s228 = smul.addr %s225, 2
      %s229 = sadd.s32 %s227, %s228
      %s230 = smul.addr %s229, 8
      %s231 = scalar_lea.vmem %s3, %s230
      %s232 = smul.u32 2, %s21
      %p233 = scmp.lt.s32.totalorder %s20, 1
      %s234 = scalar_select %p233, %s20, 1
      %p235 = scmp.lt.s32.totalorder %s232, 1
      %s236 = scalar_select %p235, %s232, 1
      %s237 = smul.addr %s234, 2
      %s238 = sadd.s32 %s236, %s237
      %s239 = smul.addr %s238, 8
      %s240 = scalar_lea.vmem %s0, %s239
      %s241 = smul.u32 2, %s21
      %p242 = scmp.lt.s32.totalorder %s20, 1
      %s243 = scalar_select %p242, %s20, 1
      %p244 = scmp.lt.s32.totalorder %s22, 0
      %s245 = scalar_select %p244, %s22, 0
      %s246 = sadd.s32 %s245, %s243
      %s247 = smul.addr %s246, 4
      %s248 = scalar_lea.vmem %s1, %s247
      %s249 = smul.u32 2, %s21
      %p250 = scmp.lt.s32.totalorder %s20, 1
      %s251 = scalar_select %p250, %s20, 1
      %p252 = scmp.lt.s32.totalorder %s249, 1
      %s253 = scalar_select %p252, %s249, 1
      %s254 = smul.addr %s251, 2
      %s255 = sadd.s32 %s253, %s254
      %s256 = smul.addr %s255, 8
      %s257 = scalar_lea.vmem %s2, %s256
      %s258 = smul.u32 2, %s21
      %s259 = smul.u32 2, %s21
      %p260 = scmp.lt.s32.totalorder %s20, 1
      %s261 = scalar_select %p260, %s20, 1
      %p262 = scmp.lt.s32.totalorder %s259, 1
      %s263 = scalar_select %p262, %s259, 1
      %s264 = smul.addr %s261, 2
      %s265 = sadd.s32 %s263, %s264
      %s266 = smul.addr %s265, 8
      %s267 = scalar_lea.vmem %s3, %s266
      %s268 = smul.u32 2, %s21
      %p269 = scmp.eq.s32.totalorder %s22, 0
      %v270 = vld [vmem:[%s257] sm:$0xff]
      %v271 = vld [vmem:[%s257 + $0x8] sm:$0xff]
      %s272 = scalar_select %p269, 1, 0
      %v273 = vstv %s272
      %vm274 = vcmp.eq.s32.totalorder %v273, 1
      %v275 = vsel %vm274, inf, %v270
      %v276 = vsel %vm274, inf, %v271
      %v277 = vld [vmem:[%s267] sm:$0xff]
      %v278 = vld [vmem:[%s267 + $0x8] sm:$0xff]
      %v279 = vsel %vm274, 16, %v277
      %v280 = vsel %vm274, 16, %v278
      %v281 = vld [vmem:[%s240] sm:$0xff]
      %v282 = vld [vmem:[%s240 + $0x8] sm:$0xff]
      %v283 = vlaneseq
      %v284 = vand.u32 %v283, 127
      %s285 = smul.u32 %s22, 128
      %v286 = vld [vmem:[%s248] sm:$0x7]
      %288 = vset.pattern.permute.xlu0 0
      %289 = vperm.xlu0 %288, %v281
      %v290 = vpop.permute.xlu0 %289
      %293 = vset.pattern.permute.xlu0 0
      %294 = vperm.xlu0 %293, %v282
      %v295 = vpop.permute.xlu0 %294
      %v297 = vlaneseq
      %v298 = vshrl.u32 %v297, 7
      %v299 = vsub.s32 0, %v298
      %v300 = vrot.slane %v286, %v299
      %v301 = vsub.f32 %v290, %v300
      %v302 = vsub.f32 %v295, %v300
      %v303 = vmul.f32 %v301, %v301
      %v304 = vmul.f32 %v302, %v302
      %305 = vset.pattern.permute.xlu0 1
      %306 = vperm.xlu0 %305, %v281
      %v307 = vpop.permute.xlu0 %306
      %309 = vset.pattern.permute.xlu0 1
      %310 = vperm.xlu0 %309, %v282
      %v311 = vpop.permute.xlu0 %310
      %v313 = vlaneseq
      %v314 = vshrl.u32 %v313, 7
      %v315 = vsub.s32 1, %v314
      %v316 = vrot.slane %v286, %v315
      %v317 = vsub.f32 %v307, %v316
      %v318 = vsub.f32 %v311, %v316
      %v319 = vmul.f32 %v317, %v317
      %v320 = vmul.f32 %v318, %v318
      %v321 = vadd.f32 %v303, %v319
      %v322 = vadd.f32 %v304, %v320
      %323 = vset.pattern.permute.xlu0 2
      %324 = vperm.xlu0 %323, %v281
      %v325 = vpop.permute.xlu0 %324
      %327 = vset.pattern.permute.xlu0 2
      %328 = vperm.xlu0 %327, %v282
      %v329 = vpop.permute.xlu0 %328
      %v331 = vlaneseq
      %v332 = vshrl.u32 %v331, 7
      %v333 = vsub.s32 2, %v332
      %v334 = vrot.slane %v286, %v333
      %v335 = vsub.f32 %v325, %v334
      %v336 = vsub.f32 %v329, %v334
      %v337 = vmul.f32 %v335, %v335
      %v338 = vmul.f32 %v336, %v336
      %v339 = vadd.f32 %v321, %v337
      %v340 = vadd.f32 %v322, %v338
      %v341 = vstv %s285
      %v342 = vadd.s32 %v341, %v284
      %vm343 = vcmp.lt.s32.totalorder %v342, 16
      %v344 = vsel %vm343, 1, 0
      %vm345 = vcmp.eq.s32.totalorder %v344, 1
      %v346 = vsel %vm345, %v339, inf
      %v347 = vsel %vm345, %v340, inf
      %348 = vmin.xlane.f32.xlu0 %v346
      %v349 = vpop.xlane.xlu0 %348
      %350 = vmin.xlane.f32.xlu0 %v347
      %v351 = vpop.xlane.xlu0 %350
      %vm352 = vcmp.eq.f32.partialorder %v346, %v349
      %vm353 = vcmp.eq.f32.partialorder %v347, %v351
      %v354 = vsel %vm352, %v284, 128
      %v355 = vsel %vm353, %v284, 128
      %v356 = vand.u32 %v354, 65535
      %v357 = vshra.s32 %v354, 16
      %v358 = vcvt.s32.f32 %v356
      %v359 = vcvt.s32.f32 %v357
      %360 = vmin.xlane.f32.xlu0 %v359
      %v361 = vpop.xlane.xlu0 %360
      %vm362 = vcmp.eq.f32.partialorder %v359, %v361
      %v363 = vsel %vm362, %v358, inf
      %364 = vmin.xlane.f32.xlu0 %v363
      %v365 = vpop.xlane.xlu0 %364
      %v366 = vcvt.f32.s32 %v365
      %v367 = vcvt.f32.s32 %v361
      %v368 = vshll.u32 %v367, 16
      %v369 = vadd.s32 %v368, %v366
      %v370 = vand.u32 %v355, 65535
      %v371 = vshra.s32 %v355, 16
      %v372 = vcvt.s32.f32 %v370
      %v373 = vcvt.s32.f32 %v371
      %374 = vmin.xlane.f32.xlu0 %v373
      %v375 = vpop.xlane.xlu0 %374
      %vm376 = vcmp.eq.f32.partialorder %v373, %v375
      %v377 = vsel %vm376, %v372, inf
      %378 = vmin.xlane.f32.xlu0 %v377
      %v379 = vpop.xlane.xlu0 %378
      %v380 = vcvt.f32.s32 %v379
      %v381 = vcvt.f32.s32 %v375
      %v382 = vshll.u32 %v381, 16
      %v383 = vadd.s32 %v382, %v380
      %v384 = vadd.s32 %v369, %v341
      %v385 = vadd.s32 %v383, %v341
      %vm386 = vcmp.eq.s32.totalorder %v284, %v369
      %vm387 = vcmp.eq.s32.totalorder %v284, %v383
      %v388 = vsel %vm386, inf, %v346
      %v389 = vsel %vm387, inf, %v347
      %390 = vmin.xlane.f32.xlu0 %v388
      %v391 = vpop.xlane.xlu0 %390
      %392 = vmin.xlane.f32.xlu0 %v389
      %v393 = vpop.xlane.xlu0 %392
      %vm394 = vcmp.eq.f32.partialorder %v388, %v391
      %vm395 = vcmp.eq.f32.partialorder %v389, %v393
      %v396 = vsel %vm394, %v284, 128
      %v397 = vsel %vm395, %v284, 128
      %v398 = vand.u32 %v396, 65535
      %v399 = vshra.s32 %v396, 16
      %v400 = vcvt.s32.f32 %v398
      %v401 = vcvt.s32.f32 %v399
      %402 = vmin.xlane.f32.xlu0 %v401
      %v403 = vpop.xlane.xlu0 %402
      %vm404 = vcmp.eq.f32.partialorder %v401, %v403
      %v405 = vsel %vm404, %v400, inf
      %406 = vmin.xlane.f32.xlu0 %v405
      %v407 = vpop.xlane.xlu0 %406
      %v408 = vcvt.f32.s32 %v407
      %v409 = vcvt.f32.s32 %v403
      %v410 = vshll.u32 %v409, 16
      %v411 = vadd.s32 %v410, %v408
      %v412 = vand.u32 %v397, 65535
      %v413 = vshra.s32 %v397, 16
      %v414 = vcvt.s32.f32 %v412
      %v415 = vcvt.s32.f32 %v413
      %416 = vmin.xlane.f32.xlu0 %v415
      %v417 = vpop.xlane.xlu0 %416
      %vm418 = vcmp.eq.f32.partialorder %v415, %v417
      %v419 = vsel %vm418, %v414, inf
      %420 = vmin.xlane.f32.xlu0 %v419
      %v421 = vpop.xlane.xlu0 %420
      %v422 = vcvt.f32.s32 %v421
      %v423 = vcvt.f32.s32 %v417
      %v424 = vshll.u32 %v423, 16
      %v425 = vadd.s32 %v424, %v422
      %v426 = vadd.s32 %v411, %v341
      %v427 = vadd.s32 %v425, %v341
      %vm428 = vcmp.eq.s32.totalorder %v284, %v411
      %vm429 = vcmp.eq.s32.totalorder %v284, %v425
      %v430 = vsel %vm428, inf, %v388
      %v431 = vsel %vm429, inf, %v389
      %432 = vmin.xlane.f32.xlu0 %v430
      %v433 = vpop.xlane.xlu0 %432
      %434 = vmin.xlane.f32.xlu0 %v431
      %v435 = vpop.xlane.xlu0 %434
      %vm436 = vcmp.eq.f32.partialorder %v430, %v433
      %vm437 = vcmp.eq.f32.partialorder %v431, %v435
      %v438 = vsel %vm436, %v284, 128
      %v439 = vsel %vm437, %v284, 128
      %v440 = vand.u32 %v438, 65535
      %v441 = vshra.s32 %v438, 16
      %v442 = vcvt.s32.f32 %v440
      %v443 = vcvt.s32.f32 %v441
      %444 = vmin.xlane.f32.xlu0 %v443
      %v445 = vpop.xlane.xlu0 %444
      %vm446 = vcmp.eq.f32.partialorder %v443, %v445
      %v447 = vsel %vm446, %v442, inf
      %448 = vmin.xlane.f32.xlu0 %v447
      %v449 = vpop.xlane.xlu0 %448
      %v450 = vcvt.f32.s32 %v449
      %v451 = vcvt.f32.s32 %v445
      %v452 = vshll.u32 %v451, 16
      %v453 = vadd.s32 %v452, %v450
      %v454 = vand.u32 %v439, 65535
      %v455 = vshra.s32 %v439, 16
      %v456 = vcvt.s32.f32 %v454
      %v457 = vcvt.s32.f32 %v455
      %458 = vmin.xlane.f32.xlu0 %v457
      %v459 = vpop.xlane.xlu0 %458
      %vm460 = vcmp.eq.f32.partialorder %v457, %v459
      %v461 = vsel %vm460, %v456, inf
      %462 = vmin.xlane.f32.xlu0 %v461
      %v463 = vpop.xlane.xlu0 %462
      %v464 = vcvt.f32.s32 %v463
      %v465 = vcvt.f32.s32 %v459
      %v466 = vshll.u32 %v465, 16
      %v467 = vadd.s32 %v466, %v464
      %v468 = vadd.s32 %v453, %v341
      %v469 = vadd.s32 %v467, %v341
      %vm470 = vcmp.eq.s32.totalorder %v284, %v453
      %vm471 = vcmp.eq.s32.totalorder %v284, %v467
      %v472 = vsel %vm470, inf, %v430
      %v473 = vsel %vm471, inf, %v431
      %474 = vmin.xlane.f32.xlu0 %v472
      %v475 = vpop.xlane.xlu0 %474
      %476 = vmin.xlane.f32.xlu0 %v473
      %v477 = vpop.xlane.xlu0 %476
      %vm478 = vcmp.eq.f32.partialorder %v472, %v475
      %vm479 = vcmp.eq.f32.partialorder %v473, %v477
      %v480 = vsel %vm478, %v284, 128
      %v481 = vsel %vm479, %v284, 128
      %v482 = vand.u32 %v480, 65535
      %v483 = vshra.s32 %v480, 16
      %v484 = vcvt.s32.f32 %v482
      %v485 = vcvt.s32.f32 %v483
      %486 = vmin.xlane.f32.xlu0 %v485
      %v487 = vpop.xlane.xlu0 %486
      %vm488 = vcmp.eq.f32.partialorder %v485, %v487
      %v489 = vsel %vm488, %v484, inf
      %490 = vmin.xlane.f32.xlu0 %v489
      %v491 = vpop.xlane.xlu0 %490
      %v492 = vcvt.f32.s32 %v491
      %v493 = vcvt.f32.s32 %v487
      %v494 = vshll.u32 %v493, 16
      %v495 = vadd.s32 %v494, %v492
      %v496 = vand.u32 %v481, 65535
      %v497 = vshra.s32 %v481, 16
      %v498 = vcvt.s32.f32 %v496
      %v499 = vcvt.s32.f32 %v497
      %500 = vmin.xlane.f32.xlu0 %v499
      %v501 = vpop.xlane.xlu0 %500
      %vm502 = vcmp.eq.f32.partialorder %v499, %v501
      %v503 = vsel %vm502, %v498, inf
      %504 = vmin.xlane.f32.xlu0 %v503
      %v505 = vpop.xlane.xlu0 %504
      %v506 = vcvt.f32.s32 %v505
      %v507 = vcvt.f32.s32 %v501
      %v508 = vshll.u32 %v507, 16
      %v509 = vadd.s32 %v508, %v506
      %v510 = vadd.s32 %v495, %v341
      %v511 = vadd.s32 %v509, %v341
      %vm512 = vcmask 7168
      %v513 = vsel %vm512, %v349, %v391
      %v514 = vsel %vm512, %v351, %v393
      %vm515 = vcmask 15360
      %v516 = vsel %vm515, %v513, %v433
      %v517 = vsel %vm515, %v514, %v435
      %vm518 = vcmask 23552
      %v519 = vsel %vm518, %v516, %v475
      %v520 = vsel %vm518, %v517, %v477
      %v521 = vsel %vm512, %v384, %v426
      %v522 = vsel %vm512, %v385, %v427
      %v523 = vsel %vm515, %v521, %v468
      %v524 = vsel %vm515, %v522, %v469
      %v525 = vsel %vm518, %v523, %v510
      %v526 = vsel %vm518, %v524, %v511
      %529 = vrot.lane.b32.xlu0 %v519, 4
      %v530 = vpop.permute.xlu0 %529
      %531 = vrot.lane.b32.xlu0 %v520, 4
      %v532 = vpop.permute.xlu0 %531
      %vm535 = vcmask 31744
      %v536 = vsel %vm535, %v275, %v530
      %v537 = vsel %vm535, %v276, %v532
      %538 = vrot.lane.b32.xlu0 %v525, 4
      %v539 = vpop.permute.xlu0 %538
      %540 = vrot.lane.b32.xlu0 %v526, 4
      %v541 = vpop.permute.xlu0 %540
      %v542 = vsel %vm535, %v279, %v539
      %v543 = vsel %vm535, %v280, %v541
      %vm544 = vcmask 64512
      %v545 = vsel %vm544, %v536, inf
      %546 = vmin.xlane.f32.xlu0 %v545
      %v547 = vpop.xlane.xlu0 %546
      %v548 = vsel %vm544, %v537, inf
      %549 = vmin.xlane.f32.xlu0 %v548
      %v550 = vpop.xlane.xlu0 %549
      %vm551 = vcmp.eq.f32.partialorder %v536, %v547
      %vm552 = vcmp.eq.f32.partialorder %v537, %v550
      %v553 = vsel %vm551, %v284, 8
      %v554 = vsel %vm552, %v284, 8
      %v555 = vsel %vm544, %v553, 2147483647
      %v556 = vand.u32 %v555, 65535
      %v557 = vshra.s32 %v555, 16
      %v558 = vcvt.s32.f32 %v556
      %v559 = vcvt.s32.f32 %v557
      %560 = vmin.xlane.f32.xlu0 %v559
      %v561 = vpop.xlane.xlu0 %560
      %vm562 = vcmp.eq.f32.partialorder %v559, %v561
      %v563 = vsel %vm562, %v558, inf
      %564 = vmin.xlane.f32.xlu0 %v563
      %v565 = vpop.xlane.xlu0 %564
      %v566 = vcvt.f32.s32 %v565
      %v567 = vcvt.f32.s32 %v561
      %v568 = vshll.u32 %v567, 16
      %v569 = vadd.s32 %v568, %v566
      %v570 = vsel %vm544, %v554, 2147483647
      %v571 = vand.u32 %v570, 65535
      %v572 = vshra.s32 %v570, 16
      %v573 = vcvt.s32.f32 %v571
      %v574 = vcvt.s32.f32 %v572
      %575 = vmin.xlane.f32.xlu0 %v574
      %v576 = vpop.xlane.xlu0 %575
      %vm577 = vcmp.eq.f32.partialorder %v574, %v576
      %v578 = vsel %vm577, %v573, inf
      %579 = vmin.xlane.f32.xlu0 %v578
      %v580 = vpop.xlane.xlu0 %579
      %v581 = vcvt.f32.s32 %v580
      %v582 = vcvt.f32.s32 %v576
      %v583 = vshll.u32 %v582, 16
      %v584 = vadd.s32 %v583, %v581
      %vm585 = vcmp.eq.s32.totalorder %v284, %v569
      %vm586 = vcmp.eq.s32.totalorder %v284, %v584
      %v587 = vsel %vm585, %v542, 0
      %v588 = vsel %vm586, %v543, 0
      %v589 = vsel %vm544, %v587, 0
      %v590 = vand.u32 %v589, 65535
      %v591 = vshrl.u32 %v589, 16
      %v592 = vcvt.s32.f32 %v590
      %v593 = vcvt.s32.f32 %v591
      %594 = vadd.xlane.f32.xlu0 %v592
      %v595 = vpop.xlane.xlu0 %594
      %596 = vadd.xlane.f32.xlu0 %v593
      %v597 = vpop.xlane.xlu0 %596
      %v598 = vcvt.f32.s32 %v595
      %v599 = vcvt.f32.s32 %v597
      %v600 = vshll.u32 %v599, 16
      %v601 = vadd.s32 %v600, %v598
      %v602 = vsel %vm544, %v588, 0
      %v603 = vand.u32 %v602, 65535
      %v604 = vshrl.u32 %v602, 16
      %v605 = vcvt.s32.f32 %v603
      %v606 = vcvt.s32.f32 %v604
      %607 = vadd.xlane.f32.xlu0 %v605
      %v608 = vpop.xlane.xlu0 %607
      %609 = vadd.xlane.f32.xlu0 %v606
      %v610 = vpop.xlane.xlu0 %609
      %v611 = vcvt.f32.s32 %v608
      %v612 = vcvt.f32.s32 %v610
      %v613 = vshll.u32 %v612, 16
      %v614 = vadd.s32 %v613, %v611
      %v615 = vsel %vm585, inf, %v536
      %v616 = vsel %vm586, inf, %v537
      %v617 = vsel %vm544, %v615, inf
      %618 = vmin.xlane.f32.xlu0 %v617
      %v619 = vpop.xlane.xlu0 %618
      %v620 = vsel %vm544, %v616, inf
      %621 = vmin.xlane.f32.xlu0 %v620
      %v622 = vpop.xlane.xlu0 %621
      %vm623 = vcmp.eq.f32.partialorder %v615, %v619
      %vm624 = vcmp.eq.f32.partialorder %v616, %v622
      %v625 = vsel %vm623, %v284, 8
      %v626 = vsel %vm624, %v284, 8
      %v627 = vsel %vm544, %v625, 2147483647
      %v628 = vand.u32 %v627, 65535
      %v629 = vshra.s32 %v627, 16
      %v630 = vcvt.s32.f32 %v628
      %v631 = vcvt.s32.f32 %v629
      %632 = vmin.xlane.f32.xlu0 %v631
      %v633 = vpop.xlane.xlu0 %632
      %vm634 = vcmp.eq.f32.partialorder %v631, %v633
      %v635 = vsel %vm634, %v630, inf
      %636 = vmin.xlane.f32.xlu0 %v635
      %v637 = vpop.xlane.xlu0 %636
      %v638 = vcvt.f32.s32 %v637
      %v639 = vcvt.f32.s32 %v633
      %v640 = vshll.u32 %v639, 16
      %v641 = vadd.s32 %v640, %v638
      %v642 = vsel %vm544, %v626, 2147483647
      %v643 = vand.u32 %v642, 65535
      %v644 = vshra.s32 %v642, 16
      %v645 = vcvt.s32.f32 %v643
      %v646 = vcvt.s32.f32 %v644
      %647 = vmin.xlane.f32.xlu0 %v646
      %v648 = vpop.xlane.xlu0 %647
      %vm649 = vcmp.eq.f32.partialorder %v646, %v648
      %v650 = vsel %vm649, %v645, inf
      %651 = vmin.xlane.f32.xlu0 %v650
      %v652 = vpop.xlane.xlu0 %651
      %v653 = vcvt.f32.s32 %v652
      %v654 = vcvt.f32.s32 %v648
      %v655 = vshll.u32 %v654, 16
      %v656 = vadd.s32 %v655, %v653
      %vm657 = vcmp.eq.s32.totalorder %v284, %v641
      %vm658 = vcmp.eq.s32.totalorder %v284, %v656
      %v659 = vsel %vm657, %v542, 0
      %v660 = vsel %vm658, %v543, 0
      %v661 = vsel %vm544, %v659, 0
      %v662 = vand.u32 %v661, 65535
      %v663 = vshrl.u32 %v661, 16
      %v664 = vcvt.s32.f32 %v662
      %v665 = vcvt.s32.f32 %v663
      %666 = vadd.xlane.f32.xlu0 %v664
      %v667 = vpop.xlane.xlu0 %666
      %668 = vadd.xlane.f32.xlu0 %v665
      %v669 = vpop.xlane.xlu0 %668
      %v670 = vcvt.f32.s32 %v667
      %v671 = vcvt.f32.s32 %v669
      %v672 = vshll.u32 %v671, 16
      %v673 = vadd.s32 %v672, %v670
      %v674 = vsel %vm544, %v660, 0
      %v675 = vand.u32 %v674, 65535
      %v676 = vshrl.u32 %v674, 16
      %v677 = vcvt.s32.f32 %v675
      %v678 = vcvt.s32.f32 %v676
      %679 = vadd.xlane.f32.xlu0 %v677
      %v680 = vpop.xlane.xlu0 %679
      %681 = vadd.xlane.f32.xlu0 %v678
      %v682 = vpop.xlane.xlu0 %681
      %v683 = vcvt.f32.s32 %v680
      %v684 = vcvt.f32.s32 %v682
      %v685 = vshll.u32 %v684, 16
      %v686 = vadd.s32 %v685, %v683
      %v687 = vsel %vm657, inf, %v615
      %v688 = vsel %vm658, inf, %v616
      %v689 = vsel %vm544, %v687, inf
      %690 = vmin.xlane.f32.xlu0 %v689
      %v691 = vpop.xlane.xlu0 %690
      %v692 = vsel %vm544, %v688, inf
      %693 = vmin.xlane.f32.xlu0 %v692
      %v694 = vpop.xlane.xlu0 %693
      %vm695 = vcmp.eq.f32.partialorder %v687, %v691
      %vm696 = vcmp.eq.f32.partialorder %v688, %v694
      %v697 = vsel %vm695, %v284, 8
      %v698 = vsel %vm696, %v284, 8
      %v699 = vsel %vm544, %v697, 2147483647
      %v700 = vand.u32 %v699, 65535
      %v701 = vshra.s32 %v699, 16
      %v702 = vcvt.s32.f32 %v700
      %v703 = vcvt.s32.f32 %v701
      %704 = vmin.xlane.f32.xlu0 %v703
      %v705 = vpop.xlane.xlu0 %704
      %vm706 = vcmp.eq.f32.partialorder %v703, %v705
      %v707 = vsel %vm706, %v702, inf
      %708 = vmin.xlane.f32.xlu0 %v707
      %v709 = vpop.xlane.xlu0 %708
      %v710 = vcvt.f32.s32 %v709
      %v711 = vcvt.f32.s32 %v705
      %v712 = vshll.u32 %v711, 16
      %v713 = vadd.s32 %v712, %v710
      %v714 = vsel %vm544, %v698, 2147483647
      %v715 = vand.u32 %v714, 65535
      %v716 = vshra.s32 %v714, 16
      %v717 = vcvt.s32.f32 %v715
      %v718 = vcvt.s32.f32 %v716
      %719 = vmin.xlane.f32.xlu0 %v718
      %v720 = vpop.xlane.xlu0 %719
      %vm721 = vcmp.eq.f32.partialorder %v718, %v720
      %v722 = vsel %vm721, %v717, inf
      %723 = vmin.xlane.f32.xlu0 %v722
      %v724 = vpop.xlane.xlu0 %723
      %v725 = vcvt.f32.s32 %v724
      %v726 = vcvt.f32.s32 %v720
      %v727 = vshll.u32 %v726, 16
      %v728 = vadd.s32 %v727, %v725
      %vm729 = vcmp.eq.s32.totalorder %v284, %v713
      %vm730 = vcmp.eq.s32.totalorder %v284, %v728
      %v731 = vsel %vm729, %v542, 0
      %v732 = vsel %vm730, %v543, 0
      %v733 = vsel %vm544, %v731, 0
      %v734 = vand.u32 %v733, 65535
      %v735 = vshrl.u32 %v733, 16
      %v736 = vcvt.s32.f32 %v734
      %v737 = vcvt.s32.f32 %v735
      %738 = vadd.xlane.f32.xlu0 %v736
      %v739 = vpop.xlane.xlu0 %738
      %740 = vadd.xlane.f32.xlu0 %v737
      %v741 = vpop.xlane.xlu0 %740
      %v742 = vcvt.f32.s32 %v739
      %v743 = vcvt.f32.s32 %v741
      %v744 = vshll.u32 %v743, 16
      %v745 = vadd.s32 %v744, %v742
      %v746 = vsel %vm544, %v732, 0
      %v747 = vand.u32 %v746, 65535
      %v748 = vshrl.u32 %v746, 16
      %v749 = vcvt.s32.f32 %v747
      %v750 = vcvt.s32.f32 %v748
      %751 = vadd.xlane.f32.xlu0 %v749
      %v752 = vpop.xlane.xlu0 %751
      %753 = vadd.xlane.f32.xlu0 %v750
      %v754 = vpop.xlane.xlu0 %753
      %v755 = vcvt.f32.s32 %v752
      %v756 = vcvt.f32.s32 %v754
      %v757 = vshll.u32 %v756, 16
      %v758 = vadd.s32 %v757, %v755
      %v759 = vsel %vm729, inf, %v687
      %v760 = vsel %vm730, inf, %v688
      %v761 = vsel %vm544, %v759, inf
      %762 = vmin.xlane.f32.xlu0 %v761
      %v763 = vpop.xlane.xlu0 %762
      %v764 = vsel %vm544, %v760, inf
      %765 = vmin.xlane.f32.xlu0 %v764
      %v766 = vpop.xlane.xlu0 %765
      %vm767 = vcmp.eq.f32.partialorder %v759, %v763
      %vm768 = vcmp.eq.f32.partialorder %v760, %v766
      %v769 = vsel %vm767, %v284, 8
      %v770 = vsel %vm768, %v284, 8
      %v771 = vsel %vm544, %v769, 2147483647
      %v772 = vand.u32 %v771, 65535
      %v773 = vshra.s32 %v771, 16
      %v774 = vcvt.s32.f32 %v772
      %v775 = vcvt.s32.f32 %v773
      %776 = vmin.xlane.f32.xlu0 %v775
      %v777 = vpop.xlane.xlu0 %776
      %vm778 = vcmp.eq.f32.partialorder %v775, %v777
      %v779 = vsel %vm778, %v774, inf
      %780 = vmin.xlane.f32.xlu0 %v779
      %v781 = vpop.xlane.xlu0 %780
      %v782 = vcvt.f32.s32 %v781
      %v783 = vcvt.f32.s32 %v777
      %v784 = vshll.u32 %v783, 16
      %v785 = vadd.s32 %v784, %v782
      %v786 = vsel %vm544, %v770, 2147483647
      %v787 = vand.u32 %v786, 65535
      %v788 = vshra.s32 %v786, 16
      %v789 = vcvt.s32.f32 %v787
      %v790 = vcvt.s32.f32 %v788
      %791 = vmin.xlane.f32.xlu0 %v790
      %v792 = vpop.xlane.xlu0 %791
      %vm793 = vcmp.eq.f32.partialorder %v790, %v792
      %v794 = vsel %vm793, %v789, inf
      %795 = vmin.xlane.f32.xlu0 %v794
      %v796 = vpop.xlane.xlu0 %795
      %v797 = vcvt.f32.s32 %v796
      %v798 = vcvt.f32.s32 %v792
      %v799 = vshll.u32 %v798, 16
      %v800 = vadd.s32 %v799, %v797
      %vm801 = vcmp.eq.s32.totalorder %v284, %v785
      %vm802 = vcmp.eq.s32.totalorder %v284, %v800
      %v803 = vsel %vm801, %v542, 0
      %v804 = vsel %vm802, %v543, 0
      %v805 = vsel %vm544, %v803, 0
      %v806 = vand.u32 %v805, 65535
      %v807 = vshrl.u32 %v805, 16
      %v808 = vcvt.s32.f32 %v806
      %v809 = vcvt.s32.f32 %v807
      %810 = vadd.xlane.f32.xlu0 %v808
      %v811 = vpop.xlane.xlu0 %810
      %812 = vadd.xlane.f32.xlu0 %v809
      %v813 = vpop.xlane.xlu0 %812
      %v814 = vcvt.f32.s32 %v811
      %v815 = vcvt.f32.s32 %v813
      %v816 = vshll.u32 %v815, 16
      %v817 = vadd.s32 %v816, %v814
      %v818 = vsel %vm544, %v804, 0
      %v819 = vand.u32 %v818, 65535
      %v820 = vshrl.u32 %v818, 16
      %v821 = vcvt.s32.f32 %v819
      %v822 = vcvt.s32.f32 %v820
      %823 = vadd.xlane.f32.xlu0 %v821
      %v824 = vpop.xlane.xlu0 %823
      %825 = vadd.xlane.f32.xlu0 %v822
      %v826 = vpop.xlane.xlu0 %825
      %v827 = vcvt.f32.s32 %v824
      %v828 = vcvt.f32.s32 %v826
      %v829 = vshll.u32 %v828, 16
      %v830 = vadd.s32 %v829, %v827
      %v831 = vsel %vm512, %v547, %v619
      %v832 = vsel %vm512, %v550, %v622
      %v833 = vsel %vm515, %v831, %v691
      %v834 = vsel %vm515, %v832, %v694
      %v835 = vsel %vm518, %v833, %v763
      %v836 = vsel %vm518, %v834, %v766
      %v837 = vsel %vm512, %v601, %v673
      %v838 = vsel %vm512, %v614, %v686
      %v839 = vsel %vm515, %v837, %v745
      %v840 = vsel %vm515, %v838, %v758
      %v841 = vsel %vm518, %v839, %v817
      %v842 = vsel %vm518, %v840, %v830
      %v843 = vmax.f32 %v835, 1e-10
      %v844 = vmax.f32 %v836, 1e-10
      %v845 = vrsqrt.pop %v843
      %v846 = vmul.f32 %v843, %v845
      %vm847 = vcmp.eq.f32.partialorder %v843, inf
      %v848 = vsel %vm847, %v843, %v846
      %vm849 = vcmp.eq.f32.partialorder %v843, 0.0
      %v850 = vand.u32 %v843, 2147483648
      %v851 = vsel %vm849, %v850, %v848
      %v852 = vrsqrt.pop %v844
      %v853 = vmul.f32 %v844, %v852
      %vm854 = vcmp.eq.f32.partialorder %v844, inf
      %v855 = vsel %vm854, %v844, %v853
      %vm856 = vcmp.eq.f32.partialorder %v844, 0.0
      %v857 = vand.u32 %v844, 2147483648
      %v858 = vsel %vm856, %v857, %v855
      %v859 = vsel %vm274, %v851, %v835
      %v860 = vsel %vm274, %v858, %v836
      %861 = vst.msk [vmem:[%s257] sm:$0xff] %vm535, %v859
      %862 = vst.msk [vmem:[%s257 + $0x8] sm:$0xff] %vm535, %v860
      %863 = vst.msk [vmem:[%s267] sm:$0xff] %vm535, %v841
      %864 = vst.msk [vmem:[%s267 + $0x8] sm:$0xff] %vm535, %v842
      %s865 = smul.u32 2, %s21
      %p866 = scmp.lt.s32.totalorder %s20, 1
      %s867 = scalar_select %p866, %s20, 1
      %p868 = scmp.lt.s32.totalorder %s865, 1
      %s869 = scalar_select %p868, %s865, 1
      %s870 = smul.addr %s867, 2
      %s871 = sadd.s32 %s869, %s870
      %s872 = smul.addr %s871, 8
      %s873 = scalar_lea.vmem %s2, %s872
      %s874 = smul.u32 2, %s21
      %p875 = scmp.lt.s32.totalorder %s20, 1
      %s876 = scalar_select %p875, %s20, 1
      %p877 = scmp.lt.s32.totalorder %s874, 1
      %s878 = scalar_select %p877, %s874, 1
      %s879 = smul.addr %s876, 2
      %s880 = sadd.s32 %s878, %s879
      %s881 = smul.addr %s880, 8
      %s882 = scalar_lea.vmem %s3, %s881
      // Predicated region
      $region29: #{tpu_custom_call.1} parent=27 // pred_check
        %p883 = pneg %p110
      $region30: #{tpu_custom_call.1} parent=27 // pred_check_branch
        %885 = sbr.rel (%p883) target = $region32
      $region31: #{tpu_custom_call.1} parent=27 // pred_region
        %s886 = smul.u32 2, %s21
      $region32: #{tpu_custom_call.1} parent=27 // pred_fallthru
        _
      // Predicated region
      $region33: #{tpu_custom_call.1} parent=27 // pred_check
        %p887 = pneg %p138
      $region34: #{tpu_custom_call.1} parent=27 // pred_check_branch
        %889 = sbr.rel (%p887) target = $region36
      $region35: #{tpu_custom_call.1} parent=27 // pred_region
        %s890 = smul.u32 2, %s21
      $region36: #{tpu_custom_call.1} parent=27 // pred_fallthru
        _
    $region28: #{tpu_custom_call.1} parent=5 // pred_fallthru
      _
    %p891 = scmp.le.s32.totalorder 2, %s10
    // Predicated region
    $region37: #{tpu_custom_call.1} parent=5 // pred_check
      %p892 = pneg %p891
    $region38: #{tpu_custom_call.1} parent=5 // pred_check_branch
      %894 = sbr.rel (%p892) target = $region40
    $region39: #{tpu_custom_call.1} parent=5 // pred_region
      %s895 = ssub.s32 %s10, 2
      // Predicated region
      $region41: #{tpu_custom_call.1} parent=39 // pred_check
        %p896 = pneg %p116
      $region42: #{tpu_custom_call.1} parent=39 // pred_check_branch
        %898 = sbr.rel (%p896) target = $region44
      $region43: #{tpu_custom_call.1} parent=39 // pred_region
        %s899 = smul.u32 2, %s24
        %p900 = scmp.lt.s32.totalorder %s23, 1
        %s901 = scalar_select %p900, %s23, 1
        %p902 = scmp.lt.s32.totalorder %s899, 1
        %s903 = scalar_select %p902, %s899, 1
        %s904 = smul.addr %s901, 2
        %s905 = sadd.s32 %s903, %s904
        %s906 = smul.addr %s905, 8
        %s907 = scalar_lea.vmem %s2, %s906
      $region44: #{tpu_custom_call.1} parent=39 // pred_fallthru
        _
      // Predicated region
      $region45: #{tpu_custom_call.1} parent=39 // pred_check
        %p908 = pneg %p144
      $region46: #{tpu_custom_call.1} parent=39 // pred_check_branch
        %910 = sbr.rel (%p908) target = $region48
      $region47: #{tpu_custom_call.1} parent=39 // pred_region
        %s911 = smul.u32 2, %s24
        %p912 = scmp.lt.s32.totalorder %s23, 1
        %s913 = scalar_select %p912, %s23, 1
        %p914 = scmp.lt.s32.totalorder %s911, 1
        %s915 = scalar_select %p914, %s911, 1
        %s916 = smul.addr %s913, 2
        %s917 = sadd.s32 %s915, %s916
        %s918 = smul.addr %s917, 8
        %s919 = scalar_lea.vmem %s3, %s918
      $region48: #{tpu_custom_call.1} parent=39 // pred_fallthru
        _
    $region40: #{tpu_custom_call.1} parent=5 // pred_fallthru
      _
  $region6: #{tpu_custom_call.1} parent=0 // loop_footer
    %s14 = sadd.s32 1, %s10
  $region7: #{tpu_custom_call.1} parent=0 // loop_footer_branch
    %9 = sbr.rel target = $region3
  $region8: #{tpu_custom_call.1} parent=0 // loop_exit
    _

</llo_original>
